<compile_context>
chip_gen: v6e
topology: v6e:2x2x1
jax: 0.10.0
libtpu: 0.0.40
codegen_flags: <defaults>
</compile_context>

<pallas_src>
import functools

import jax
import jax.numpy as jnp
from jax.experimental import pallas as pl
from jax.experimental.pallas import tpu as pltpu

OUT_PAD = 128        # logits padded from 10 -> 128 lanes for lane-dense stores
EPS = 1e-5
MAX_TILE_B = 512     # max batch tile for the gridded path
SINGLE_SHOT_B = 256  # up to this batch, run a single no-grid invocation

_DIMS = ((128, 512), (512, 256), (256, 128), (128, OUT_PAD))
_FLOPS_PER_ROW = 2 * sum(fi * fo for fi, fo in _DIMS)
_WEIGHT_BYTES = sum(fi * fo for fi, fo in _DIMS) * 2 + sum(fo for _, fo in _DIMS) * 4


def _round_up(x, m):
    return ((x + m - 1) // m) * m


def _mlp_kernel(x_ref,
                w1_ref, b1_ref,
                w2_ref, b2_ref,
                w3_ref, b3_ref,
                w4_ref, b4_ref,
                out_ref):
    # BN scale/shift and Linear bias are pre-folded into (W', b').  Matmuls
    # run on the MXU in bf16 (weights pre-cast, activations cast just before
    # each dot); accumulation, bias add and ReLU stay f32.
    h = jnp.dot(x_ref[...].astype(jnp.bfloat16), w1_ref[...],
                preferred_element_type=jnp.float32)
    h = jnp.maximum(h + b1_ref[...], 0.0)

    h = jnp.dot(h.astype(jnp.bfloat16), w2_ref[...],
                preferred_element_type=jnp.float32)
    h = jnp.maximum(h + b2_ref[...], 0.0)

    h = jnp.dot(h.astype(jnp.bfloat16), w3_ref[...],
                preferred_element_type=jnp.float32)
    h = jnp.maximum(h + b3_ref[...], 0.0)

    out = jnp.dot(h.astype(jnp.bfloat16), w4_ref[...],
                  preferred_element_type=jnp.float32)
    out_ref[...] = (out + b4_ref[...]).astype(out_ref.dtype)


def fold_params(params, eps=EPS):
    """One-time offline folding: BN affine + bias -> weights (bf16); pad out layer."""
    folded = {}
    for li in (1, 2, 3):
        gamma, beta, mean, var = params[f"bn{li}"]
        s = gamma * jax.lax.rsqrt(var + eps)          # per-feature scale
        t = beta - mean * s                           # per-feature shift
        folded[f"w{li}"] = (params[f"w{li}"] * s[None, :]).astype(jnp.bfloat16)
        folded[f"b{li}"] = (params[f"b{li}"] * s + t)[None, :].astype(jnp.float32)
    # Zero-pad the 10-wide output layer to 128 lanes (lane-dense stores).
    w4, b4 = params["w4"], params["b4"]
    w4p = jnp.zeros((w4.shape[0], OUT_PAD), jnp.float32).at[:, :w4.shape[1]].set(w4)
    b4p = jnp.zeros((1, OUT_PAD), jnp.float32).at[0, :b4.shape[0]].set(b4)
    folded["w4"] = w4p.astype(jnp.bfloat16)
    folded["b4"] = b4p
    return folded


@functools.partial(jax.jit, static_argnames=("num_classes",))
def classifier_mnist_forward(x, folded, num_classes=10):
    """x: (B, 128) float32. Returns (B, num_classes) float32 logits."""
    B, D = x.shape
    weight_args = (folded["w1"], folded["b1"],
                   folded["w2"], folded["b2"],
                   folded["w3"], folded["b3"],
                   folded["w4"], folded["b4"])
    cost = pl.CostEstimate(
        flops=B * _FLOPS_PER_ROW,
        transcendentals=0,
        bytes_accessed=B * (D + OUT_PAD) * 4 + _WEIGHT_BYTES)

    if B <= SINGLE_SHOT_B:
        # Small-batch path: single shot, full-array VMEM blocks, no grid,
        # minimal fixed per-step overhead.
        out = pl.pallas_call(
            _mlp_kernel,
            out_shape=jax.ShapeDtypeStruct((B, OUT_PAD), jnp.float32),
            in_specs=[pl.BlockSpec(memory_space=pltpu.VMEM)] * (1 + len(weight_args)),
            out_specs=pl.BlockSpec(memory_space=pltpu.VMEM),
            cost_estimate=cost,
        )(x, *weight_args)
        return out[:, :num_classes]

    # Large-batch path: grid over batch with a big adaptive tile (up to 512
    # rows) chosen so there are at least 2 tiles (both TCs get work on v7x).
    # Weights stay VMEM-resident (constant index_map); x / out are pipelined
    # by Pallas.  No pre-padding of x: the last block may be partial and its
    # out-of-range rows are never written back (out_shape has exactly B rows).
    tile_b = min(MAX_TILE_B, _round_up((B + 1) // 2, 128))
    n_tiles = pl.cdiv(B, tile_b)

    def resident(a):  # full-array block, same block index every step -> no re-DMA
        return pl.BlockSpec(a.shape, lambda i: (0, 0))

    out = pl.pallas_call(
        _mlp_kernel,
        out_shape=jax.ShapeDtypeStruct((B, OUT_PAD), jnp.float32),
        grid=(n_tiles,),
        in_specs=[pl.BlockSpec((tile_b, D), lambda i: (i, 0))]
                 + [resident(a) for a in weight_args],
        out_specs=pl.BlockSpec((tile_b, OUT_PAD), lambda i: (i, 0)),
        compiler_params=pltpu.CompilerParams(
            dimension_semantics=("parallel",)),   # 2x TC on v7x, no-op on v5e/v6e
        cost_estimate=cost,
    )(x, *weight_args)
    return out[:, :num_classes]


def init_params(key):
    """Deterministic synthetic parameters matching ClassifierMnist.__init__."""
    dims = [(128, 512), (512, 256), (256, 128), (128, 10)]
    params = {}
    keys = jax.random.split(key, 16)
    ki = 0
    for li, (fin, fout) in enumerate(dims, start=1):
        bound = 1.0 / jnp.sqrt(fin)
        # Stored as (in, out) == torch weight (out, in) transposed.
        params[f"w{li}"] = jax.random.uniform(
            keys[ki], (fin, fout), jnp.float32, -bound, bound); ki += 1
        params[f"b{li}"] = jax.random.uniform(
            keys[ki], (fout,), jnp.float32, -bound, bound); ki += 1
    # BatchNorm1d params (gamma, beta, running_mean, running_var) for the
    # three hidden layers; non-trivial values so folding is exercised.
    for li, n in zip((1, 2, 3), (512, 256, 128)):
        gamma = 1.0 + 0.1 * jax.random.normal(keys[ki], (n,), jnp.float32); ki += 1
        beta = 0.1 * jax.random.normal(keys[ki], (n,), jnp.float32); ki += 1
        mean = 0.05 * jnp.arange(n, dtype=jnp.float32) / n
        var = 1.0 + 0.01 * jnp.arange(n, dtype=jnp.float32) / n
        params[f"bn{li}"] = (gamma, beta, mean, var)
    return params


def reference_forward(x, params):
    """Pure-JAX f32 reference matching the (eval-mode) PyTorch module."""
    h = x
    for li in (1, 2, 3):
        h = h @ params[f"w{li}"] + params[f"b{li}"]
        gamma, beta, mean, var = params[f"bn{li}"]
        h = (h - mean) * jax.lax.rsqrt(var + EPS) * gamma + beta
        h = jnp.maximum(h, 0.0)
    return h @ params["w4"] + params["b4"]


if __name__ == "__main__":
    key = jax.random.PRNGKey(0)
    pkey, xkey1, xkey2 = jax.random.split(key, 3)
    params = init_params(pkey)
    folded = fold_params(params)          # hoisted: computed once, reused per call

    # bf16 matmuls vs f32 reference: loosened tolerances (~1e-2 relative).
    ATOL = 5e-2
    RTOL = 5e-2

    # --- small-batch path (no grid) ---
    B_small = 8
    x_small = jax.random.normal(xkey1, (B_small, 128), jnp.float32)
    out_small = jax.block_until_ready(classifier_mnist_forward(x_small, folded))
    ref_small = reference_forward(x_small, params)
    assert out_small.shape == (B_small, 10), out_small.shape
    assert jnp.allclose(out_small, ref_small, atol=ATOL, rtol=RTOL), (
        f"small-batch max abs err {jnp.max(jnp.abs(out_small - ref_small))}")

    # --- gridded path (batch > SINGLE_SHOT_B, non-multiple -> partial last block) ---
    B_big = 600
    x_big = jax.random.normal(xkey2, (B_big, 128), jnp.float32)
    out_big = jax.block_until_ready(classifier_mnist_forward(x_big, folded))
    ref_big = reference_forward(x_big, params)
    assert out_big.shape == (B_big, 10), out_big.shape
    assert jnp.allclose(out_big, ref_big, atol=ATOL, rtol=RTOL), (
        f"big-batch max abs err {jnp.max(jnp.abs(out_big - ref_big))}")

    print("KERNEL_OK")
</pallas_src>

<mosaic_0001>
module attributes {stable_mosaic.version = 11 : i64} {
  func.func @_mlp_kernel(%arg0: memref<8x128xf32, #tpu.memory_space<vmem>>, %arg1: memref<128x512xbf16, #tpu.memory_space<vmem>>, %arg2: memref<1x512xf32, #tpu.memory_space<vmem>>, %arg3: memref<512x256xbf16, #tpu.memory_space<vmem>>, %arg4: memref<1x256xf32, #tpu.memory_space<vmem>>, %arg5: memref<256x128xbf16, #tpu.memory_space<vmem>>, %arg6: memref<1x128xf32, #tpu.memory_space<vmem>>, %arg7: memref<128x128xbf16, #tpu.memory_space<vmem>>, %arg8: memref<1x128xf32, #tpu.memory_space<vmem>>, %arg9: memref<8x128xf32, #tpu.memory_space<vmem>>) attributes {dimension_semantics = [], scalar_prefetch = 0 : i64, scratch_operands = 0 : i64, tpu.core_type = #tpu.core_type<tc>} {
    %c0 = arith.constant 0 : index
    %c0_0 = arith.constant 0 : index
    %0 = vector.load %arg0[%c0, %c0_0] : memref<8x128xf32, #tpu.memory_space<vmem>>, vector<8x128xf32>
    %1 = arith.truncf %0 : vector<8x128xf32> to vector<8x128xbf16>
    %c0_1 = arith.constant 0 : index
    %c0_2 = arith.constant 0 : index
    %2 = vector.load %arg1[%c0_1, %c0_2] : memref<128x512xbf16, #tpu.memory_space<vmem>>, vector<128x512xbf16>
    %cst = arith.constant dense<0.000000e+00> : vector<8x512xf32>
    %3 = tpu.matmul %1, %2, %cst {dimension_numbers = #tpu.dot_dimension_numbers<[1], [0], [0], [1], [0, 0, 1, 1], [], []>} : vector<8x128xbf16>, vector<128x512xbf16>, vector<8x512xf32> -> vector<8x512xf32>
    %c0_3 = arith.constant 0 : index
    %c0_4 = arith.constant 0 : index
    %4 = vector.load %arg2[%c0_3, %c0_4] : memref<1x512xf32, #tpu.memory_space<vmem>>, vector<1x512xf32>
    %5 = vector.broadcast %4 : vector<1x512xf32> to vector<8x512xf32>
    %6 = arith.addf %3, %5 : vector<8x512xf32>
    %cst_5 = arith.constant 0.000000e+00 : f32
    %7 = vector.broadcast %cst_5 : f32 to vector<8x512xf32>
    %8 = arith.maximumf %6, %7 : vector<8x512xf32>
    %9 = arith.truncf %8 : vector<8x512xf32> to vector<8x512xbf16>
    %c0_6 = arith.constant 0 : index
    %c0_7 = arith.constant 0 : index
    %10 = vector.load %arg3[%c0_6, %c0_7] : memref<512x256xbf16, #tpu.memory_space<vmem>>, vector<512x256xbf16>
    %cst_8 = arith.constant dense<0.000000e+00> : vector<8x256xf32>
    %11 = tpu.matmul %9, %10, %cst_8 {dimension_numbers = #tpu.dot_dimension_numbers<[1], [0], [0], [1], [0, 0, 1, 1], [], []>} : vector<8x512xbf16>, vector<512x256xbf16>, vector<8x256xf32> -> vector<8x256xf32>
    %c0_9 = arith.constant 0 : index
    %c0_10 = arith.constant 0 : index
    %12 = vector.load %arg4[%c0_9, %c0_10] : memref<1x256xf32, #tpu.memory_space<vmem>>, vector<1x256xf32>
    %13 = vector.broadcast %12 : vector<1x256xf32> to vector<8x256xf32>
    %14 = arith.addf %11, %13 : vector<8x256xf32>
    %cst_11 = arith.constant 0.000000e+00 : f32
    %15 = vector.broadcast %cst_11 : f32 to vector<8x256xf32>
    %16 = arith.maximumf %14, %15 : vector<8x256xf32>
    %17 = arith.truncf %16 : vector<8x256xf32> to vector<8x256xbf16>
    %c0_12 = arith.constant 0 : index
    %c0_13 = arith.constant 0 : index
    %18 = vector.load %arg5[%c0_12, %c0_13] : memref<256x128xbf16, #tpu.memory_space<vmem>>, vector<256x128xbf16>
    %cst_14 = arith.constant dense<0.000000e+00> : vector<8x128xf32>
    %19 = tpu.matmul %17, %18, %cst_14 {dimension_numbers = #tpu.dot_dimension_numbers<[1], [0], [0], [1], [0, 0, 1, 1], [], []>} : vector<8x256xbf16>, vector<256x128xbf16>, vector<8x128xf32> -> vector<8x128xf32>
    %c0_15 = arith.constant 0 : index
    %c0_16 = arith.constant 0 : index
    %20 = vector.load %arg6[%c0_15, %c0_16] : memref<1x128xf32, #tpu.memory_space<vmem>>, vector<1x128xf32>
    %21 = vector.broadcast %20 : vector<1x128xf32> to vector<8x128xf32>
    %22 = arith.addf %19, %21 : vector<8x128xf32>
    %cst_17 = arith.constant 0.000000e+00 : f32
    %23 = vector.broadcast %cst_17 : f32 to vector<8x128xf32>
    %24 = arith.maximumf %22, %23 : vector<8x128xf32>
    %25 = arith.truncf %24 : vector<8x128xf32> to vector<8x128xbf16>
    %c0_18 = arith.constant 0 : index
    %c0_19 = arith.constant 0 : index
    %26 = vector.load %arg7[%c0_18, %c0_19] : memref<128x128xbf16, #tpu.memory_space<vmem>>, vector<128x128xbf16>
    %cst_20 = arith.constant dense<0.000000e+00> : vector<8x128xf32>
    %27 = tpu.matmul %25, %26, %cst_20 {dimension_numbers = #tpu.dot_dimension_numbers<[1], [0], [0], [1], [0, 0, 1, 1], [], []>} : vector<8x128xbf16>, vector<128x128xbf16>, vector<8x128xf32> -> vector<8x128xf32>
    %c0_21 = arith.constant 0 : index
    %c0_22 = arith.constant 0 : index
    %28 = vector.load %arg8[%c0_21, %c0_22] : memref<1x128xf32, #tpu.memory_space<vmem>>, vector<1x128xf32>
    %29 = vector.broadcast %28 : vector<1x128xf32> to vector<8x128xf32>
    %30 = arith.addf %27, %29 : vector<8x128xf32>
    %c0_23 = arith.constant 0 : index
    %c0_24 = arith.constant 0 : index
    %31 = vector.load %arg9[%c0_23, %c0_24] : memref<8x128xf32, #tpu.memory_space<vmem>>, vector<8x128xf32>
    tpu.vector_store %arg9[%c0_23, %c0_24], %30 {strides = array<i32>} : memref<8x128xf32, #tpu.memory_space<vmem>>, vector<8x128xf32>,
    return
  }
}

</mosaic_0001>

<llo_original>
// kernel: classifier_mnist_forward.1
$region0: #{classifier_mnist_forward.1}
  #allocation0 [shape = 'u32[]', space=smem, size = 0x4, offset = 0x4, fixed_abs, tag = 'smem constant byte address 0x4 - core index']
  #allocation1 [shape = 'u32[144,128]{1,0:T(1,128)}', space=vmem, size = 0x12000, scoped, tag = 'internal scratch']
  %s0 = inlined_call_operand.hbm [shape: f32[8,128], index: 0, kind: input, shape index: {}]
  %s1 = inlined_call_operand.hbm [shape: bf16[128,512], index: 1, kind: input, shape index: {}]
  %s2 = inlined_call_operand.hbm [shape: f32[1,512], index: 2, kind: input, shape index: {}]
  %s3 = inlined_call_operand.hbm [shape: bf16[512,256], index: 3, kind: input, shape index: {}]
  %s4 = inlined_call_operand.vmem [shape: f32[1,256], index: 4, kind: input, shape index: {}]
  %s5 = inlined_call_operand.hbm [shape: bf16[256,128], index: 5, kind: input, shape index: {}]
  %s6 = inlined_call_operand.vmem [shape: f32[1,128], index: 6, kind: input, shape index: {}]
  %s7 = inlined_call_operand.hbm [shape: bf16[128,128], index: 7, kind: input, shape index: {}]
  %s8 = inlined_call_operand.vmem [shape: f32[1,128], index: 8, kind: input, shape index: {}]
  %s9 = inlined_call_operand.hbm [shape: f32[8,128], index: 9, kind: output, shape index: {}]
  %s10 = sld [smem:[#allocation0]]
  $region70: #{classifier_mnist_forward.1} parent=0
    _
  %s12 = ssub.s32 1, %s10
  %s13 = scalar_select 0, %s12, %s10
  $region1: #{classifier_mnist_forward.1} parent=0
    #allocation2 [shape = 'u8[4096]{0}', space=vmem, size = 0x1000, scoped, tag = 'input window, operand 0, single buffered']
    #allocation3 [shape = 's32[1]{0}', space=sflag, size = 0x4, scoped, tag = 'scoped memory for classifier_mnist_forward.1']
    #allocation4 [shape = 's32[1]{0}', space=sflag, size = 0x4, scoped, tag = 'scoped memory for classifier_mnist_forward.1']
    #allocation5 [shape = 'u8[131072]{0}', space=vmem, size = 0x20000, scoped, tag = 'input window, operand 1, single buffered']
    #allocation6 [shape = 's32[1]{0}', space=sflag, size = 0x4, scoped, tag = 'scoped memory for classifier_mnist_forward.1']
    #allocation7 [shape = 'u8[2048]{0}', space=vmem, size = 0x800, scoped, tag = 'input window, operand 2, single buffered']
    #allocation8 [shape = 'u8[262144]{0}', space=vmem, size = 0x40000, scoped, tag = 'input window, operand 3, single buffered']
    #allocation9 [shape = 's32[1]{0}', space=sflag, size = 0x4, scoped, tag = 'scoped memory for classifier_mnist_forward.1']
    #allocation10 [shape = 'u8[65536]{0}', space=vmem, size = 0x10000, scoped, tag = 'input window, operand 5, single buffered']
    #allocation11 [shape = 'u8[32768]{0}', space=vmem, size = 0x8000, scoped, tag = 'input window, operand 7, single buffered']
    #allocation12 [shape = 's32[1]{0}', space=sflag, size = 0x4, scoped, tag = 'scoped memory for classifier_mnist_forward.1']
    #allocation13 [shape = 'u8[4096]{0}', space=vmem, size = 0x1000, scoped, tag = 'output window, operand 0, single buffered']
    %14 = vsyncpa [#allocation3], 0
    %15 = vsyncpa [#allocation6], 0
    %16 = vsyncpa [#allocation9], 0
    %17 = vsyncpa [#allocation12], 0
    %18 = vsyncpa [#allocation4], 0
    // Predicated region
    $region2: #{classifier_mnist_forward.1} parent=1 // pred_check
      _
    $region3: #{classifier_mnist_forward.1} parent=1 // pred_check_branch
      %20 = sbr.rel (0) target = $region5
    $region4: #{classifier_mnist_forward.1} parent=1 // pred_region
      %s22 = ssub.s32 128, 128
      %23 = vsyncadd [#allocation3], %s22
      %s25 = sshll.u32 [#allocation2], 4
      %s26 = int_to_ptr.vmem [resolvable:$true] %s25
      %28 = dma.hbm_to_vmem [thread:$0]  %s0, 128, %s26, [#allocation3]
    $region5: #{classifier_mnist_forward.1} parent=1 // pred_fallthru
      _
    // Predicated region
    $region6: #{classifier_mnist_forward.1} parent=1 // pred_check
      _
    $region7: #{classifier_mnist_forward.1} parent=1 // pred_check_branch
      %30 = sbr.rel (0) target = $region9
    $region8: #{classifier_mnist_forward.1} parent=1 // pred_region
      %s32 = ssub.s32 4096, 4096
      %33 = vsyncadd [#allocation6], %s32
      %s34 = sshll.u32 [#allocation5], 4
      %s35 = int_to_ptr.vmem [resolvable:$true] %s34
      %40 = dma.hbm_to_vmem [thread:$0]  %s1, 4096, %s35, [#allocation6], 256, 256, 16
    $region9: #{classifier_mnist_forward.1} parent=1 // pred_fallthru
      _
    // Predicated region
    $region10: #{classifier_mnist_forward.1} parent=1 // pred_check
      _
    $region11: #{classifier_mnist_forward.1} parent=1 // pred_check_branch
      %42 = sbr.rel (0) target = $region13
    $region12: #{classifier_mnist_forward.1} parent=1 // pred_region
      %s44 = ssub.s32 64, 64
      %45 = vsyncadd [#allocation6], %s44
      %s47 = sshll.u32 [#allocation7], 4
      %s48 = int_to_ptr.vmem [resolvable:$true] %s47
      %50 = dma.hbm_to_vmem [thread:$0]  %s2, 64, %s48, [#allocation6]
    $region13: #{classifier_mnist_forward.1} parent=1 // pred_fallthru
      _
    // Predicated region
    $region14: #{classifier_mnist_forward.1} parent=1 // pred_check
      _
    $region15: #{classifier_mnist_forward.1} parent=1 // pred_check_branch
      %52 = sbr.rel (0) target = $region17
    $region16: #{classifier_mnist_forward.1} parent=1 // pred_region
      %s54 = ssub.s32 8192, 8192
      %55 = vsyncadd [#allocation9], %s54
      %s56 = sshll.u32 [#allocation8], 4
      %s57 = int_to_ptr.vmem [resolvable:$true] %s56
      %62 = dma.hbm_to_vmem [thread:$0]  %s3, 8192, %s57, [#allocation9], 128, 128, 8
    $region17: #{classifier_mnist_forward.1} parent=1 // pred_fallthru
      _
    // Predicated region
    $region18: #{classifier_mnist_forward.1} parent=1 // pred_check
      _
    $region19: #{classifier_mnist_forward.1} parent=1 // pred_check_branch
      %64 = sbr.rel (0) target = $region21
    $region20: #{classifier_mnist_forward.1} parent=1 // pred_region
      _
    $region21: #{classifier_mnist_forward.1} parent=1 // pred_fallthru
      _
    // Predicated region
    $region22: #{classifier_mnist_forward.1} parent=1 // pred_check
      _
    $region23: #{classifier_mnist_forward.1} parent=1 // pred_check_branch
      %66 = sbr.rel (0) target = $region25
    $region24: #{classifier_mnist_forward.1} parent=1 // pred_region
      %s68 = ssub.s32 2048, 2048
      %69 = vsyncadd [#allocation9], %s68
      %s70 = sshll.u32 [#allocation10], 4
      %s71 = int_to_ptr.vmem [resolvable:$true] %s70
      %76 = dma.hbm_to_vmem [thread:$0]  %s5, 2048, %s71, [#allocation9], 64, 64, 4
    $region25: #{classifier_mnist_forward.1} parent=1 // pred_fallthru
      _
    // Predicated region
    $region26: #{classifier_mnist_forward.1} parent=1 // pred_check
      _
    $region27: #{classifier_mnist_forward.1} parent=1 // pred_check_branch
      %78 = sbr.rel (0) target = $region29
    $region28: #{classifier_mnist_forward.1} parent=1 // pred_region
      _
    $region29: #{classifier_mnist_forward.1} parent=1 // pred_fallthru
      _
    // Predicated region
    $region30: #{classifier_mnist_forward.1} parent=1 // pred_check
      _
    $region31: #{classifier_mnist_forward.1} parent=1 // pred_check_branch
      %80 = sbr.rel (0) target = $region33
    $region32: #{classifier_mnist_forward.1} parent=1 // pred_region
      %s82 = ssub.s32 1024, 1024
      %83 = vsyncadd [#allocation12], %s82
      %s84 = sshll.u32 [#allocation11], 4
      %s85 = int_to_ptr.vmem [resolvable:$true] %s84
      %90 = dma.hbm_to_vmem [thread:$0]  %s7, 1024, %s85, [#allocation12], 64, 64, 4
    $region33: #{classifier_mnist_forward.1} parent=1 // pred_fallthru
      _
    // Predicated region
    $region34: #{classifier_mnist_forward.1} parent=1 // pred_check
      _
    $region35: #{classifier_mnist_forward.1} parent=1 // pred_check_branch
      %92 = sbr.rel (0) target = $region37
    $region36: #{classifier_mnist_forward.1} parent=1 // pred_region
      _
    $region37: #{classifier_mnist_forward.1} parent=1 // pred_fallthru
      _
    // Predicated region
    $region38: #{classifier_mnist_forward.1} parent=1 // pred_check
      _
    $region39: #{classifier_mnist_forward.1} parent=1 // pred_check_branch
      %94 = sbr.rel (0) target = $region41
    $region40: #{classifier_mnist_forward.1} parent=1 // pred_region
      %95 = dma.done [#allocation3], 128
    $region41: #{classifier_mnist_forward.1} parent=1 // pred_fallthru
      _
    // Predicated region
    $region42: #{classifier_mnist_forward.1} parent=1 // pred_check
      _
    $region43: #{classifier_mnist_forward.1} parent=1 // pred_check_branch
      %97 = sbr.rel (0) target = $region45
    $region44: #{classifier_mnist_forward.1} parent=1 // pred_region
      %98 = dma.done [#allocation6], 4096
    $region45: #{classifier_mnist_forward.1} parent=1 // pred_fallthru
      _
    // Predicated region
    $region46: #{classifier_mnist_forward.1} parent=1 // pred_check
      _
    $region47: #{classifier_mnist_forward.1} parent=1 // pred_check_branch
      %100 = sbr.rel (0) target = $region49
    $region48: #{classifier_mnist_forward.1} parent=1 // pred_region
      %101 = dma.done [#allocation6], 64
    $region49: #{classifier_mnist_forward.1} parent=1 // pred_fallthru
      _
    // Predicated region
    $region50: #{classifier_mnist_forward.1} parent=1 // pred_check
      _
    $region51: #{classifier_mnist_forward.1} parent=1 // pred_check_branch
      %103 = sbr.rel (0) target = $region53
    $region52: #{classifier_mnist_forward.1} parent=1 // pred_region
      %104 = dma.done [#allocation9], 8192
    $region53: #{classifier_mnist_forward.1} parent=1 // pred_fallthru
      _
    // Predicated region
    $region54: #{classifier_mnist_forward.1} parent=1 // pred_check
      _
    $region55: #{classifier_mnist_forward.1} parent=1 // pred_check_branch
      %106 = sbr.rel (0) target = $region57
    $region56: #{classifier_mnist_forward.1} parent=1 // pred_region
      %107 = dma.done [#allocation9], 2048
    $region57: #{classifier_mnist_forward.1} parent=1 // pred_fallthru
      _
    // Predicated region
    $region58: #{classifier_mnist_forward.1} parent=1 // pred_check
      _
    $region59: #{classifier_mnist_forward.1} parent=1 // pred_check_branch
      %109 = sbr.rel (0) target = $region61
    $region60: #{classifier_mnist_forward.1} parent=1 // pred_region
      %110 = dma.done [#allocation12], 1024
    $region61: #{classifier_mnist_forward.1} parent=1 // pred_fallthru
      _
    %v112 = vld [vmem:[#allocation2] sm:$0xff]
    %v113 = vpack.c.bf16 %v112, %v112
    %v114 = vld [vmem:[#allocation5] sm:$0xff]
    %v115 = vld [vmem:[#allocation5 + $0x8] sm:$0xff]
    %v116 = vld [vmem:[#allocation5 + $0x10] sm:$0xff]
    %v117 = vld [vmem:[#allocation5 + $0x18] sm:$0xff]
    %v118 = vld [vmem:[#allocation5 + $0x20] sm:$0xff]
    %v119 = vld [vmem:[#allocation5 + $0x28] sm:$0xff]
    %v120 = vld [vmem:[#allocation5 + $0x30] sm:$0xff]
    %v121 = vld [vmem:[#allocation5 + $0x38] sm:$0xff]
    %v122 = vld [vmem:[#allocation5 + $0x40] sm:$0xff]
    %v123 = vld [vmem:[#allocation5 + $0x48] sm:$0xff]
    %v124 = vld [vmem:[#allocation5 + $0x50] sm:$0xff]
    %v125 = vld [vmem:[#allocation5 + $0x58] sm:$0xff]
    %v126 = vld [vmem:[#allocation5 + $0x60] sm:$0xff]
    %v127 = vld [vmem:[#allocation5 + $0x68] sm:$0xff]
    %v128 = vld [vmem:[#allocation5 + $0x70] sm:$0xff]
    %v129 = vld [vmem:[#allocation5 + $0x78] sm:$0xff]
    %v130 = vld [vmem:[#allocation5 + $0x80] sm:$0xff]
    %v131 = vld [vmem:[#allocation5 + $0x88] sm:$0xff]
    %v132 = vld [vmem:[#allocation5 + $0x90] sm:$0xff]
    %v133 = vld [vmem:[#allocation5 + $0x98] sm:$0xff]
    %v134 = vld [vmem:[#allocation5 + $0xa0] sm:$0xff]
    %v135 = vld [vmem:[#allocation5 + $0xa8] sm:$0xff]
    %v136 = vld [vmem:[#allocation5 + $0xb0] sm:$0xff]
    %v137 = vld [vmem:[#allocation5 + $0xb8] sm:$0xff]
    %v138 = vld [vmem:[#allocation5 + $0xc0] sm:$0xff]
    %v139 = vld [vmem:[#allocation5 + $0xc8] sm:$0xff]
    %v140 = vld [vmem:[#allocation5 + $0xd0] sm:$0xff]
    %v141 = vld [vmem:[#allocation5 + $0xd8] sm:$0xff]
    %v142 = vld [vmem:[#allocation5 + $0xe0] sm:$0xff]
    %v143 = vld [vmem:[#allocation5 + $0xe8] sm:$0xff]
    %v144 = vld [vmem:[#allocation5 + $0xf0] sm:$0xff]
    %v145 = vld [vmem:[#allocation5 + $0xf8] sm:$0xff]
    %v146 = vld [vmem:[#allocation7] sm:$0xf]
    %v148 = vlaneseq
    %v149 = vshrl.u32 %v148, 7
    %v150 = vsub.s32 0, %v149
    %v151 = vrot.slane %v146, %v150
    %v152 = vlaneseq
    %v153 = vshrl.u32 %v152, 7
    %v154 = vsub.s32 1, %v153
    %v155 = vrot.slane %v146, %v154
    %v156 = vlaneseq
    %v157 = vshrl.u32 %v156, 7
    %v158 = vsub.s32 2, %v157
    %v159 = vrot.slane %v146, %v158
    %v160 = vlaneseq
    %v161 = vshrl.u32 %v160, 7
    %v162 = vsub.s32 3, %v161
    %v163 = vrot.slane %v146, %v162
    %v200 = vunpack.c.l.b16 %v114
    %v201 = vunpack.c.h.b16 %v114
    %v202 = vunpack.c.l.b16 %v115
    %v203 = vunpack.c.h.b16 %v115
    %v204 = vunpack.c.l.b16 %v116
    %v205 = vunpack.c.h.b16 %v116
    %v206 = vunpack.c.l.b16 %v117
    %v207 = vunpack.c.h.b16 %v117
    %v208 = vunpack.c.l.b16 %v118
    %v209 = vunpack.c.h.b16 %v118
    %v210 = vunpack.c.l.b16 %v119
    %v211 = vunpack.c.h.b16 %v119
    %v212 = vunpack.c.l.b16 %v120
    %v213 = vunpack.c.h.b16 %v120
    %v214 = vunpack.c.l.b16 %v121
    %v215 = vunpack.c.h.b16 %v121
    %v216 = vunpack.c.l.b16 %v122
    %v217 = vunpack.c.h.b16 %v122
    %v218 = vunpack.c.l.b16 %v123
    %v219 = vunpack.c.h.b16 %v123
    %v220 = vunpack.c.l.b16 %v124
    %v221 = vunpack.c.h.b16 %v124
    %v222 = vunpack.c.l.b16 %v125
    %v223 = vunpack.c.h.b16 %v125
    %v224 = vunpack.c.l.b16 %v126
    %v225 = vunpack.c.h.b16 %v126
    %v226 = vunpack.c.l.b16 %v127
    %v227 = vunpack.c.h.b16 %v127
    %v228 = vunpack.c.l.b16 %v128
    %v229 = vunpack.c.h.b16 %v128
    %v230 = vunpack.c.l.b16 %v129
    %v231 = vunpack.c.h.b16 %v129
    %v232 = vunpack.c.l.b16 %v130
    %v233 = vunpack.c.h.b16 %v130
    %v234 = vunpack.c.l.b16 %v131
    %v235 = vunpack.c.h.b16 %v131
    %v236 = vunpack.c.l.b16 %v132
    %v237 = vunpack.c.h.b16 %v132
    %v238 = vunpack.c.l.b16 %v133
    %v239 = vunpack.c.h.b16 %v133
    %v240 = vunpack.c.l.b16 %v134
    %v241 = vunpack.c.h.b16 %v134
    %v242 = vunpack.c.l.b16 %v135
    %v243 = vunpack.c.h.b16 %v135
    %v244 = vunpack.c.l.b16 %v136
    %v245 = vunpack.c.h.b16 %v136
    %v246 = vunpack.c.l.b16 %v137
    %v247 = vunpack.c.h.b16 %v137
    %v248 = vunpack.c.l.b16 %v138
    %v249 = vunpack.c.h.b16 %v138
    %v250 = vunpack.c.l.b16 %v139
    %v251 = vunpack.c.h.b16 %v139
    %v252 = vunpack.c.l.b16 %v140
    %v253 = vunpack.c.h.b16 %v140
    %v254 = vunpack.c.l.b16 %v141
    %v255 = vunpack.c.h.b16 %v141
    %v256 = vunpack.c.l.b16 %v142
    %v257 = vunpack.c.h.b16 %v142
    %v258 = vunpack.c.l.b16 %v143
    %v259 = vunpack.c.h.b16 %v143
    %v260 = vunpack.c.l.b16 %v144
    %v261 = vunpack.c.h.b16 %v144
    %v262 = vunpack.c.l.b16 %v145
    %v263 = vunpack.c.h.b16 %v145
    %v264 = vpack.c.b16 %v204, %v200
    %v265 = vpack.c.b16 %v205, %v201
    %v266 = vpack.c.b16 %v206, %v202
    %v267 = vpack.c.b16 %v207, %v203
    %v268 = vpack.c.b16 %v212, %v208
    %v269 = vpack.c.b16 %v213, %v209
    %v270 = vpack.c.b16 %v214, %v210
    %v271 = vpack.c.b16 %v215, %v211
    %v272 = vpack.c.b16 %v220, %v216
    %v273 = vpack.c.b16 %v221, %v217
    %v274 = vpack.c.b16 %v222, %v218
    %v275 = vpack.c.b16 %v223, %v219
    %v276 = vpack.c.b16 %v228, %v224
    %v277 = vpack.c.b16 %v229, %v225
    %v278 = vpack.c.b16 %v230, %v226
    %v279 = vpack.c.b16 %v231, %v227
    %v280 = vpack.c.b16 %v236, %v232
    %v281 = vpack.c.b16 %v237, %v233
    %v282 = vpack.c.b16 %v238, %v234
    %v283 = vpack.c.b16 %v239, %v235
    %v284 = vpack.c.b16 %v244, %v240
    %v285 = vpack.c.b16 %v245, %v241
    %v286 = vpack.c.b16 %v246, %v242
    %v287 = vpack.c.b16 %v247, %v243
    %v288 = vpack.c.b16 %v252, %v248
    %v289 = vpack.c.b16 %v253, %v249
    %v290 = vpack.c.b16 %v254, %v250
    %v291 = vpack.c.b16 %v255, %v251
    %v292 = vpack.c.b16 %v260, %v256
    %v293 = vpack.c.b16 %v261, %v257
    %v294 = vpack.c.b16 %v262, %v258
    %v295 = vpack.c.b16 %v263, %v259
    %328 = vmatprep.subr.bf16.mxu0 %v293
    %329 = vmatpush1.bf16.msra.mxu0 %v292
    %330 = vmatprep.subr.bf16.mxu0 %v289
    %331 = vmatpush1.bf16.msra.mxu0 %v288
    %332 = vmatprep.subr.bf16.mxu0 %v285
    %333 = vmatpush1.bf16.msra.mxu0 %v284
    %334 = vmatprep.subr.bf16.mxu0 %v281
    %335 = vmatpush1.bf16.msra.mxu0 %v280
    %336 = vmatprep.subr.bf16.mxu0 %v277
    %337 = vmatpush1.bf16.msra.mxu0 %v276
    %338 = vmatprep.subr.bf16.mxu0 %v273
    %339 = vmatpush1.bf16.msra.mxu0 %v272
    %340 = vmatprep.subr.bf16.mxu0 %v269
    %341 = vmatpush1.bf16.msra.mxu0 %v268
    %342 = vmatprep.subr.bf16.mxu0 %v265
    %343 = vmatpush1.bf16.msra.mxu0 %v264
    %344 = vmatprep.subr.bf16.mxu0 0
    %345 = vmatpush2.bf16.msra.mxu0 0
    %346 = vmatprep.subr.bf16.mxu0 0
    %347 = vmatpush2.bf16.msra.mxu0 0
    %348 = vmatprep.subr.bf16.mxu0 0
    %349 = vmatpush2.bf16.msra.mxu0 0
    %350 = vmatprep.subr.bf16.mxu0 0
    %351 = vmatpush2.bf16.msra.mxu0 0
    %352 = vmatprep.subr.bf16.mxu0 0
    %353 = vmatpush2.bf16.msra.mxu0 0
    %354 = vmatprep.subr.bf16.mxu0 0
    %355 = vmatpush2.bf16.msra.mxu0 0
    %356 = vmatprep.subr.bf16.mxu0 0
    %357 = vmatpush2.bf16.msra.mxu0 0
    %358 = vmatprep.subr.bf16.mxu0 0
    %359 = vmatpush2.bf16.msra.mxu0 0
    %360 = vmatprep.mubr.bf16.mxu0 0
    %361 = vmatmul.mubr.bf16.gmra.mxu0 %v113
    %v362 = vpop.f32.mrf.mxu0
    %v363 = vadd.f32 %v151, %v362
    %v364 = vpop.f32.mrf.mxu0
    %v365 = vadd.f32 %v155, %v364
    %v366 = vpop.f32.mrf.mxu0
    %v367 = vpop.f32.mrf.mxu0
    %368 = vdwg.mxu0
    %369 = vmatprep.subr.bf16.mxu0 %v295
    %370 = vmatpush1.bf16.msra.mxu0 %v294
    %371 = vmatprep.subr.bf16.mxu0 %v291
    %372 = vmatpush1.bf16.msra.mxu0 %v290
    %373 = vmatprep.subr.bf16.mxu0 %v287
    %374 = vmatpush1.bf16.msra.mxu0 %v286
    %375 = vmatprep.subr.bf16.mxu0 %v283
    %376 = vmatpush1.bf16.msra.mxu0 %v282
    %377 = vmatprep.subr.bf16.mxu0 %v279
    %378 = vmatpush1.bf16.msra.mxu0 %v278
    %379 = vmatprep.subr.bf16.mxu0 %v275
    %380 = vmatpush1.bf16.msra.mxu0 %v274
    %381 = vmatprep.subr.bf16.mxu0 %v271
    %382 = vmatpush1.bf16.msra.mxu0 %v270
    %383 = vmatprep.subr.bf16.mxu0 %v267
    %384 = vmatpush1.bf16.msra.mxu0 %v266
    %385 = vmatprep.subr.bf16.mxu0 0
    %386 = vmatpush2.bf16.msra.mxu0 0
    %387 = vmatprep.subr.bf16.mxu0 0
    %388 = vmatpush2.bf16.msra.mxu0 0
    %389 = vmatprep.subr.bf16.mxu0 0
    %390 = vmatpush2.bf16.msra.mxu0 0
    %391 = vmatprep.subr.bf16.mxu0 0
    %392 = vmatpush2.bf16.msra.mxu0 0
    %393 = vmatprep.subr.bf16.mxu0 0
    %394 = vmatpush2.bf16.msra.mxu0 0
    %395 = vmatprep.subr.bf16.mxu0 0
    %396 = vmatpush2.bf16.msra.mxu0 0
    %397 = vmatprep.subr.bf16.mxu0 0
    %398 = vmatpush2.bf16.msra.mxu0 0
    %399 = vmatprep.subr.bf16.mxu0 0
    %400 = vmatpush2.bf16.msra.mxu0 0
    %401 = vmatprep.mubr.bf16.mxu0 0
    %402 = vmatmul.mubr.bf16.gmra.mxu0 %v113
    %v403 = vpop.f32.mrf.mxu0
    %v404 = vadd.f32 %v159, %v403
    %v405 = vpop.f32.mrf.mxu0
    %v406 = vadd.f32 %v163, %v405
    %v407 = vpop.f32.mrf.mxu0
    %v408 = vpop.f32.mrf.mxu0
    %409 = vdwg.mxu0
    %v410 = vmax.f32 %v363, 0.0
    %v411 = vmax.f32 %v365, 0.0
    %v412 = vmax.f32 %v404, 0.0
    %v413 = vmax.f32 %v406, 0.0
    %v414 = vpack.c.bf16 %v410, %v410
    %v415 = vpack.c.bf16 %v411, %v411
    %v416 = vpack.c.bf16 %v412, %v412
    %v417 = vpack.c.bf16 %v413, %v413
    %v418 = vld [vmem:[#allocation8] sm:$0xff]
    %v419 = vld [vmem:[#allocation8 + $0x8] sm:$0xff]
    %v420 = vld [vmem:[#allocation8 + $0x10] sm:$0xff]
    %v421 = vld [vmem:[#allocation8 + $0x18] sm:$0xff]
    %v422 = vld [vmem:[#allocation8 + $0x20] sm:$0xff]
    %v423 = vld [vmem:[#allocation8 + $0x28] sm:$0xff]
    %v424 = vld [vmem:[#allocation8 + $0x30] sm:$0xff]
    %v425 = vld [vmem:[#allocation8 + $0x38] sm:$0xff]
    %v426 = vld [vmem:[#allocation8 + $0x40] sm:$0xff]
    %v427 = vld [vmem:[#allocation8 + $0x48] sm:$0xff]
    %v428 = vld [vmem:[#allocation8 + $0x50] sm:$0xff]
    %v429 = vld [vmem:[#allocation8 + $0x58] sm:$0xff]
    %v430 = vld [vmem:[#allocation8 + $0x60] sm:$0xff]
    %v431 = vld [vmem:[#allocation8 + $0x68] sm:$0xff]
    %v432 = vld [vmem:[#allocation8 + $0x70] sm:$0xff]
    %v433 = vld [vmem:[#allocation8 + $0x78] sm:$0xff]
    %v434 = vld [vmem:[#allocation8 + $0x80] sm:$0xff]
    %v435 = vld [vmem:[#allocation8 + $0x88] sm:$0xff]
    %v436 = vld [vmem:[#allocation8 + $0x90] sm:$0xff]
    %v437 = vld [vmem:[#allocation8 + $0x98] sm:$0xff]
    %v438 = vld [vmem:[#allocation8 + $0xa0] sm:$0xff]
    %v439 = vld [vmem:[#allocation8 + $0xa8] sm:$0xff]
    %v440 = vld [vmem:[#allocation8 + $0xb0] sm:$0xff]
    %v441 = vld [vmem:[#allocation8 + $0xb8] sm:$0xff]
    %v442 = vld [vmem:[#allocation8 + $0xc0] sm:$0xff]
    %v443 = vld [vmem:[#allocation8 + $0xc8] sm:$0xff]
    %v444 = vld [vmem:[#allocation8 + $0xd0] sm:$0xff]
    %v445 = vld [vmem:[#allocation8 + $0xd8] sm:$0xff]
    %v446 = vld [vmem:[#allocation8 + $0xe0] sm:$0xff]
    %v447 = vld [vmem:[#allocation8 + $0xe8] sm:$0xff]
    %v448 = vld [vmem:[#allocation8 + $0xf0] sm:$0xff]
    %v449 = vld [vmem:[#allocation8 + $0xf8] sm:$0xff]
    %v450 = vld [vmem:[#allocation8 + $0x100] sm:$0xff]
    %v451 = vld [vmem:[#allocation8 + $0x108] sm:$0xff]
    %v452 = vld [vmem:[#allocation8 + $0x110] sm:$0xff]
    %v453 = vld [vmem:[#allocation8 + $0x118] sm:$0xff]
    %v454 = vld [vmem:[#allocation8 + $0x120] sm:$0xff]
    %v455 = vld [vmem:[#allocation8 + $0x128] sm:$0xff]
    %v456 = vld [vmem:[#allocation8 + $0x130] sm:$0xff]
    %v457 = vld [vmem:[#allocation8 + $0x138] sm:$0xff]
    %v458 = vld [vmem:[#allocation8 + $0x140] sm:$0xff]
    %v459 = vld [vmem:[#allocation8 + $0x148] sm:$0xff]
    %v460 = vld [vmem:[#allocation8 + $0x150] sm:$0xff]
    %v461 = vld [vmem:[#allocation8 + $0x158] sm:$0xff]
    %v462 = vld [vmem:[#allocation8 + $0x160] sm:$0xff]
    %v463 = vld [vmem:[#allocation8 + $0x168] sm:$0xff]
    %v464 = vld [vmem:[#allocation8 + $0x170] sm:$0xff]
    %v465 = vld [vmem:[#allocation8 + $0x178] sm:$0xff]
    %v466 = vld [vmem:[#allocation8 + $0x180] sm:$0xff]
    %v467 = vld [vmem:[#allocation8 + $0x188] sm:$0xff]
    %v468 = vld [vmem:[#allocation8 + $0x190] sm:$0xff]
    %v469 = vld [vmem:[#allocation8 + $0x198] sm:$0xff]
    %v470 = vld [vmem:[#allocation8 + $0x1a0] sm:$0xff]
    %v471 = vld [vmem:[#allocation8 + $0x1a8] sm:$0xff]
    %v472 = vld [vmem:[#allocation8 + $0x1b0] sm:$0xff]
    %v473 = vld [vmem:[#allocation8 + $0x1b8] sm:$0xff]
    %v474 = vld [vmem:[#allocation8 + $0x1c0] sm:$0xff]
    %v475 = vld [vmem:[#allocation8 + $0x1c8] sm:$0xff]
    %v476 = vld [vmem:[#allocation8 + $0x1d0] sm:$0xff]
    %v477 = vld [vmem:[#allocation8 + $0x1d8] sm:$0xff]
    %v478 = vld [vmem:[#allocation8 + $0x1e0] sm:$0xff]
    %v479 = vld [vmem:[#allocation8 + $0x1e8] sm:$0xff]
    %v480 = vld [vmem:[#allocation8 + $0x1f0] sm:$0xff]
    %v481 = vld [vmem:[#allocation8 + $0x1f8] sm:$0xff]
    %v482 = vld [vmem:[%s4] sm:$0x3]
    %v484 = vlaneseq
    %v485 = vshrl.u32 %v484, 7
    %v486 = vsub.s32 0, %v485
    %v487 = vrot.slane %v482, %v486
    %v488 = vlaneseq
    %v489 = vshrl.u32 %v488, 7
    %v490 = vsub.s32 1, %v489
    %v491 = vrot.slane %v482, %v490
    %v558 = vunpack.c.l.b16 %v418
    %v559 = vunpack.c.h.b16 %v418
    %v560 = vunpack.c.l.b16 %v419
    %v561 = vunpack.c.h.b16 %v419
    %v562 = vunpack.c.l.b16 %v420
    %v563 = vunpack.c.h.b16 %v420
    %v564 = vunpack.c.l.b16 %v421
    %v565 = vunpack.c.h.b16 %v421
    %v566 = vunpack.c.l.b16 %v422
    %v567 = vunpack.c.h.b16 %v422
    %v568 = vunpack.c.l.b16 %v423
    %v569 = vunpack.c.h.b16 %v423
    %v570 = vunpack.c.l.b16 %v424
    %v571 = vunpack.c.h.b16 %v424
    %v572 = vunpack.c.l.b16 %v425
    %v573 = vunpack.c.h.b16 %v425
    %v574 = vunpack.c.l.b16 %v426
    %v575 = vunpack.c.h.b16 %v426
    %v576 = vunpack.c.l.b16 %v427
    %v577 = vunpack.c.h.b16 %v427
    %v578 = vunpack.c.l.b16 %v428
    %v579 = vunpack.c.h.b16 %v428
    %v580 = vunpack.c.l.b16 %v429
    %v581 = vunpack.c.h.b16 %v429
    %v582 = vunpack.c.l.b16 %v430
    %v583 = vunpack.c.h.b16 %v430
    %v584 = vunpack.c.l.b16 %v431
    %v585 = vunpack.c.h.b16 %v431
    %v586 = vunpack.c.l.b16 %v432
    %v587 = vunpack.c.h.b16 %v432
    %v588 = vunpack.c.l.b16 %v433
    %v589 = vunpack.c.h.b16 %v433
    %v590 = vunpack.c.l.b16 %v434
    %v591 = vunpack.c.h.b16 %v434
    %v592 = vunpack.c.l.b16 %v435
    %v593 = vunpack.c.h.b16 %v435
    %v594 = vunpack.c.l.b16 %v436
    %v595 = vunpack.c.h.b16 %v436
    %v596 = vunpack.c.l.b16 %v437
    %v597 = vunpack.c.h.b16 %v437
    %v598 = vunpack.c.l.b16 %v438
    %v599 = vunpack.c.h.b16 %v438
    %v600 = vunpack.c.l.b16 %v439
    %v601 = vunpack.c.h.b16 %v439
    %v602 = vunpack.c.l.b16 %v440
    %v603 = vunpack.c.h.b16 %v440
    %v604 = vunpack.c.l.b16 %v441
    %v605 = vunpack.c.h.b16 %v441
    %v606 = vunpack.c.l.b16 %v442
    %v607 = vunpack.c.h.b16 %v442
    %v608 = vunpack.c.l.b16 %v443
    %v609 = vunpack.c.h.b16 %v443
    %v610 = vunpack.c.l.b16 %v444
    %v611 = vunpack.c.h.b16 %v444
    %v612 = vunpack.c.l.b16 %v445
    %v613 = vunpack.c.h.b16 %v445
    %v614 = vunpack.c.l.b16 %v446
    %v615 = vunpack.c.h.b16 %v446
    %v616 = vunpack.c.l.b16 %v447
    %v617 = vunpack.c.h.b16 %v447
    %v618 = vunpack.c.l.b16 %v448
    %v619 = vunpack.c.h.b16 %v448
    %v620 = vunpack.c.l.b16 %v449
    %v621 = vunpack.c.h.b16 %v449
    %v622 = vunpack.c.l.b16 %v450
    %v623 = vunpack.c.h.b16 %v450
    %v624 = vunpack.c.l.b16 %v451
    %v625 = vunpack.c.h.b16 %v451
    %v626 = vunpack.c.l.b16 %v452
    %v627 = vunpack.c.h.b16 %v452
    %v628 = vunpack.c.l.b16 %v453
    %v629 = vunpack.c.h.b16 %v453
    %v630 = vunpack.c.l.b16 %v454
    %v631 = vunpack.c.h.b16 %v454
    %v632 = vunpack.c.l.b16 %v455
    %v633 = vunpack.c.h.b16 %v455
    %v634 = vunpack.c.l.b16 %v456
    %v635 = vunpack.c.h.b16 %v456
    %v636 = vunpack.c.l.b16 %v457
    %v637 = vunpack.c.h.b16 %v457
    %v638 = vunpack.c.l.b16 %v458
    %v639 = vunpack.c.h.b16 %v458
    %v640 = vunpack.c.l.b16 %v459
    %v641 = vunpack.c.h.b16 %v459
    %v642 = vunpack.c.l.b16 %v460
    %v643 = vunpack.c.h.b16 %v460
    %v644 = vunpack.c.l.b16 %v461
    %v645 = vunpack.c.h.b16 %v461
    %v646 = vunpack.c.l.b16 %v462
    %v647 = vunpack.c.h.b16 %v462
    %v648 = vunpack.c.l.b16 %v463
    %v649 = vunpack.c.h.b16 %v463
    %v650 = vunpack.c.l.b16 %v464
    %v651 = vunpack.c.h.b16 %v464
    %v652 = vunpack.c.l.b16 %v465
    %v653 = vunpack.c.h.b16 %v465
    %v654 = vunpack.c.l.b16 %v466
    %v655 = vunpack.c.h.b16 %v466
    %v656 = vunpack.c.l.b16 %v467
    %v657 = vunpack.c.h.b16 %v467
    %v658 = vunpack.c.l.b16 %v468
    %v659 = vunpack.c.h.b16 %v468
    %v660 = vunpack.c.l.b16 %v469
    %v661 = vunpack.c.h.b16 %v469
    %v662 = vunpack.c.l.b16 %v470
    %v663 = vunpack.c.h.b16 %v470
    %v664 = vunpack.c.l.b16 %v471
    %v665 = vunpack.c.h.b16 %v471
    %v666 = vunpack.c.l.b16 %v472
    %v667 = vunpack.c.h.b16 %v472
    %v668 = vunpack.c.l.b16 %v473
    %v669 = vunpack.c.h.b16 %v473
    %v670 = vunpack.c.l.b16 %v474
    %v671 = vunpack.c.h.b16 %v474
    %v672 = vunpack.c.l.b16 %v475
    %v673 = vunpack.c.h.b16 %v475
    %v674 = vunpack.c.l.b16 %v476
    %v675 = vunpack.c.h.b16 %v476
    %v676 = vunpack.c.l.b16 %v477
    %v677 = vunpack.c.h.b16 %v477
    %v678 = vunpack.c.l.b16 %v478
    %v679 = vunpack.c.h.b16 %v478
    %v680 = vunpack.c.l.b16 %v479
    %v681 = vunpack.c.h.b16 %v479
    %v682 = vunpack.c.l.b16 %v480
    %v683 = vunpack.c.h.b16 %v480
    %v684 = vunpack.c.l.b16 %v481
    %v685 = vunpack.c.h.b16 %v481
    %v686 = vpack.c.b16 %v560, %v558
    %v687 = vpack.c.b16 %v561, %v559
    %v688 = vpack.c.b16 %v564, %v562
    %v689 = vpack.c.b16 %v565, %v563
    %v690 = vpack.c.b16 %v568, %v566
    %v691 = vpack.c.b16 %v569, %v567
    %v692 = vpack.c.b16 %v572, %v570
    %v693 = vpack.c.b16 %v573, %v571
    %v694 = vpack.c.b16 %v576, %v574
    %v695 = vpack.c.b16 %v577, %v575
    %v696 = vpack.c.b16 %v580, %v578
    %v697 = vpack.c.b16 %v581, %v579
    %v698 = vpack.c.b16 %v584, %v582
    %v699 = vpack.c.b16 %v585, %v583
    %v700 = vpack.c.b16 %v588, %v586
    %v701 = vpack.c.b16 %v589, %v587
    %v702 = vpack.c.b16 %v592, %v590
    %v703 = vpack.c.b16 %v593, %v591
    %v704 = vpack.c.b16 %v596, %v594
    %v705 = vpack.c.b16 %v597, %v595
    %v706 = vpack.c.b16 %v600, %v598
    %v707 = vpack.c.b16 %v601, %v599
    %v708 = vpack.c.b16 %v604, %v602
    %v709 = vpack.c.b16 %v605, %v603
    %v710 = vpack.c.b16 %v608, %v606
    %v711 = vpack.c.b16 %v609, %v607
    %v712 = vpack.c.b16 %v612, %v610
    %v713 = vpack.c.b16 %v613, %v611
    %v714 = vpack.c.b16 %v616, %v614
    %v715 = vpack.c.b16 %v617, %v615
    %v716 = vpack.c.b16 %v620, %v618
    %v717 = vpack.c.b16 %v621, %v619
    %v718 = vpack.c.b16 %v624, %v622
    %v719 = vpack.c.b16 %v625, %v623
    %v720 = vpack.c.b16 %v628, %v626
    %v721 = vpack.c.b16 %v629, %v627
    %v722 = vpack.c.b16 %v632, %v630
    %v723 = vpack.c.b16 %v633, %v631
    %v724 = vpack.c.b16 %v636, %v634
    %v725 = vpack.c.b16 %v637, %v635
    %v726 = vpack.c.b16 %v640, %v638
    %v727 = vpack.c.b16 %v641, %v639
    %v728 = vpack.c.b16 %v644, %v642
    %v729 = vpack.c.b16 %v645, %v643
    %v730 = vpack.c.b16 %v648, %v646
    %v731 = vpack.c.b16 %v649, %v647
    %v732 = vpack.c.b16 %v652, %v650
    %v733 = vpack.c.b16 %v653, %v651
    %v734 = vpack.c.b16 %v656, %v654
    %v735 = vpack.c.b16 %v657, %v655
    %v736 = vpack.c.b16 %v660, %v658
    %v737 = vpack.c.b16 %v661, %v659
    %v738 = vpack.c.b16 %v664, %v662
    %v739 = vpack.c.b16 %v665, %v663
    %v740 = vpack.c.b16 %v668, %v666
    %v741 = vpack.c.b16 %v669, %v667
    %v742 = vpack.c.b16 %v672, %v670
    %v743 = vpack.c.b16 %v673, %v671
    %v744 = vpack.c.b16 %v676, %v674
    %v745 = vpack.c.b16 %v677, %v675
    %v746 = vpack.c.b16 %v680, %v678
    %v747 = vpack.c.b16 %v681, %v679
    %v748 = vpack.c.b16 %v684, %v682
    %v749 = vpack.c.b16 %v685, %v683
    %814 = vmatprep.subr.bf16.mxu0 %v701
    %815 = vmatpush1.bf16.msra.mxu0 %v700
    %816 = vmatprep.subr.bf16.mxu0 %v699
    %817 = vmatpush1.bf16.msra.mxu0 %v698
    %818 = vmatprep.subr.bf16.mxu0 %v697
    %819 = vmatpush1.bf16.msra.mxu0 %v696
    %820 = vmatprep.subr.bf16.mxu0 %v695
    %821 = vmatpush1.bf16.msra.mxu0 %v694
    %822 = vmatprep.subr.bf16.mxu0 %v693
    %823 = vmatpush1.bf16.msra.mxu0 %v692
    %824 = vmatprep.subr.bf16.mxu0 %v691
    %825 = vmatpush1.bf16.msra.mxu0 %v690
    %826 = vmatprep.subr.bf16.mxu0 %v689
    %827 = vmatpush1.bf16.msra.mxu0 %v688
    %828 = vmatprep.subr.bf16.mxu0 %v687
    %829 = vmatpush1.bf16.msra.mxu0 %v686
    %830 = vmatprep.subr.bf16.mxu0 %v717
    %831 = vmatpush2.bf16.msra.mxu0 %v716
    %832 = vmatprep.subr.bf16.mxu0 %v715
    %833 = vmatpush2.bf16.msra.mxu0 %v714
    %834 = vmatprep.subr.bf16.mxu0 %v713
    %835 = vmatpush2.bf16.msra.mxu0 %v712
    %836 = vmatprep.subr.bf16.mxu0 %v711
    %837 = vmatpush2.bf16.msra.mxu0 %v710
    %838 = vmatprep.subr.bf16.mxu0 %v709
    %839 = vmatpush2.bf16.msra.mxu0 %v708
    %840 = vmatprep.subr.bf16.mxu0 %v707
    %841 = vmatpush2.bf16.msra.mxu0 %v706
    %842 = vmatprep.subr.bf16.mxu0 %v705
    %843 = vmatpush2.bf16.msra.mxu0 %v704
    %844 = vmatprep.subr.bf16.mxu0 %v703
    %845 = vmatpush2.bf16.msra.mxu0 %v702
    %846 = vmatprep.mubr.bf16.mxu0 %v415
    %847 = vmatmul.mubr.bf16.gmra.mxu0 %v414
    %v848 = vpop.f32.mrf.mxu0
    %v849 = vadd.f32 %v487, %v848
    %v850 = vpop.f32.mrf.mxu0
    %v851 = vadd.f32 %v491, %v850
    %v852 = vpop.f32.mrf.mxu0
    %v853 = vpop.f32.mrf.mxu0
    %854 = vdwg.mxu0
    %855 = vmatprep.subr.bf16.mxu0 %v733
    %856 = vmatpush1.bf16.msra.mxu0 %v732
    %857 = vmatprep.subr.bf16.mxu0 %v731
    %858 = vmatpush1.bf16.msra.mxu0 %v730
    %859 = vmatprep.subr.bf16.mxu0 %v729
    %860 = vmatpush1.bf16.msra.mxu0 %v728
    %861 = vmatprep.subr.bf16.mxu0 %v727
    %862 = vmatpush1.bf16.msra.mxu0 %v726
    %863 = vmatprep.subr.bf16.mxu0 %v725
    %864 = vmatpush1.bf16.msra.mxu0 %v724
    %865 = vmatprep.subr.bf16.mxu0 %v723
    %866 = vmatpush1.bf16.msra.mxu0 %v722
    %867 = vmatprep.subr.bf16.mxu0 %v721
    %868 = vmatpush1.bf16.msra.mxu0 %v720
    %869 = vmatprep.subr.bf16.mxu0 %v719
    %870 = vmatpush1.bf16.msra.mxu0 %v718
    %871 = vmatprep.subr.bf16.mxu0 %v749
    %872 = vmatpush2.bf16.msra.mxu0 %v748
    %873 = vmatprep.subr.bf16.mxu0 %v747
    %874 = vmatpush2.bf16.msra.mxu0 %v746
    %875 = vmatprep.subr.bf16.mxu0 %v745
    %876 = vmatpush2.bf16.msra.mxu0 %v744
    %877 = vmatprep.subr.bf16.mxu0 %v743
    %878 = vmatpush2.bf16.msra.mxu0 %v742
    %879 = vmatprep.subr.bf16.mxu0 %v741
    %880 = vmatpush2.bf16.msra.mxu0 %v740
    %881 = vmatprep.subr.bf16.mxu0 %v739
    %882 = vmatpush2.bf16.msra.mxu0 %v738
    %883 = vmatprep.subr.bf16.mxu0 %v737
    %884 = vmatpush2.bf16.msra.mxu0 %v736
    %885 = vmatprep.subr.bf16.mxu0 %v735
    %886 = vmatpush2.bf16.msra.mxu0 %v734
    %887 = vmatprep.mubr.bf16.mxu0 %v417
    %888 = vmatmul.mubr.bf16.gmra.mxu0 %v416
    %v889 = vpop.f32.mrf.mxu0
    %v890 = vadd.f32 %v849, %v889
    %v891 = vpop.f32.mrf.mxu0
    %v892 = vadd.f32 %v851, %v891
    %v893 = vpop.f32.mrf.mxu0
    %v894 = vpop.f32.mrf.mxu0
    %895 = vdwg.mxu0
    %v896 = vmax.f32 %v890, 0.0
    %v897 = vmax.f32 %v892, 0.0
    %v898 = vpack.c.bf16 %v896, %v896
    %v899 = vpack.c.bf16 %v897, %v897
    %v900 = vld [vmem:[#allocation10] sm:$0xf]
    %v901 = vld [vmem:[#allocation10 + $0x4] sm:$0xf]
    %v902 = vld [vmem:[#allocation10 + $0x8] sm:$0xf]
    %v903 = vld [vmem:[#allocation10 + $0xc] sm:$0xf]
    %v904 = vld [vmem:[#allocation10 + $0x10] sm:$0xf]
    %v905 = vld [vmem:[#allocation10 + $0x14] sm:$0xf]
    %v906 = vld [vmem:[#allocation10 + $0x18] sm:$0xf]
    %v907 = vld [vmem:[#allocation10 + $0x1c] sm:$0xf]
    %v908 = vld [vmem:[#allocation10 + $0x20] sm:$0xf]
    %v909 = vld [vmem:[#allocation10 + $0x24] sm:$0xf]
    %v910 = vld [vmem:[#allocation10 + $0x28] sm:$0xf]
    %v911 = vld [vmem:[#allocation10 + $0x2c] sm:$0xf]
    %v912 = vld [vmem:[#allocation10 + $0x30] sm:$0xf]
    %v913 = vld [vmem:[#allocation10 + $0x34] sm:$0xf]
    %v914 = vld [vmem:[#allocation10 + $0x38] sm:$0xf]
    %v915 = vld [vmem:[#allocation10 + $0x3c] sm:$0xf]
    %v916 = vld [vmem:[#allocation10 + $0x40] sm:$0xf]
    %v917 = vld [vmem:[#allocation10 + $0x44] sm:$0xf]
    %v918 = vld [vmem:[#allocation10 + $0x48] sm:$0xf]
    %v919 = vld [vmem:[#allocation10 + $0x4c] sm:$0xf]
    %v920 = vld [vmem:[#allocation10 + $0x50] sm:$0xf]
    %v921 = vld [vmem:[#allocation10 + $0x54] sm:$0xf]
    %v922 = vld [vmem:[#allocation10 + $0x58] sm:$0xf]
    %v923 = vld [vmem:[#allocation10 + $0x5c] sm:$0xf]
    %v924 = vld [vmem:[#allocation10 + $0x60] sm:$0xf]
    %v925 = vld [vmem:[#allocation10 + $0x64] sm:$0xf]
    %v926 = vld [vmem:[#allocation10 + $0x68] sm:$0xf]
    %v927 = vld [vmem:[#allocation10 + $0x6c] sm:$0xf]
    %v928 = vld [vmem:[#allocation10 + $0x70] sm:$0xf]
    %v929 = vld [vmem:[#allocation10 + $0x74] sm:$0xf]
    %v930 = vld [vmem:[#allocation10 + $0x78] sm:$0xf]
    %v931 = vld [vmem:[#allocation10 + $0x7c] sm:$0xf]
    %v932 = vld [vmem:[%s6] sm:$0x1]
    %v934 = vlaneseq
    %v935 = vshrl.u32 %v934, 7
    %v936 = vsub.s32 0, %v935
    %v937 = vrot.slane %v932, %v936
    %v971 = vunpack.c.l.b16 %v900
    %v972 = vunpack.c.l.b16 %v901
    %v973 = vunpack.c.l.b16 %v902
    %v974 = vunpack.c.l.b16 %v903
    %v975 = vunpack.c.l.b16 %v904
    %v976 = vunpack.c.l.b16 %v905
    %v977 = vunpack.c.l.b16 %v906
    %v978 = vunpack.c.l.b16 %v907
    %v979 = vunpack.c.l.b16 %v908
    %v980 = vunpack.c.l.b16 %v909
    %v981 = vunpack.c.l.b16 %v910
    %v982 = vunpack.c.l.b16 %v911
    %v983 = vunpack.c.l.b16 %v912
    %v984 = vunpack.c.l.b16 %v913
    %v985 = vunpack.c.l.b16 %v914
    %v986 = vunpack.c.l.b16 %v915
    %v987 = vunpack.c.l.b16 %v916
    %v988 = vunpack.c.l.b16 %v917
    %v989 = vunpack.c.l.b16 %v918
    %v990 = vunpack.c.l.b16 %v919
    %v991 = vunpack.c.l.b16 %v920
    %v992 = vunpack.c.l.b16 %v921
    %v993 = vunpack.c.l.b16 %v922
    %v994 = vunpack.c.l.b16 %v923
    %v995 = vunpack.c.l.b16 %v924
    %v996 = vunpack.c.l.b16 %v925
    %v997 = vunpack.c.l.b16 %v926
    %v998 = vunpack.c.l.b16 %v927
    %v999 = vunpack.c.l.b16 %v928
    %v1000 = vunpack.c.l.b16 %v929
    %v1001 = vunpack.c.l.b16 %v930
    %v1002 = vunpack.c.l.b16 %v931
    %v1003 = vpack.c.b16 %v972, %v971
    %v1004 = vpack.c.b16 %v974, %v973
    %v1005 = vpack.c.b16 %v976, %v975
    %v1006 = vpack.c.b16 %v978, %v977
    %v1007 = vpack.c.b16 %v980, %v979
    %v1008 = vpack.c.b16 %v982, %v981
    %v1009 = vpack.c.b16 %v984, %v983
    %v1010 = vpack.c.b16 %v986, %v985
    %v1011 = vpack.c.b16 %v988, %v987
    %v1012 = vpack.c.b16 %v990, %v989
    %v1013 = vpack.c.b16 %v992, %v991
    %v1014 = vpack.c.b16 %v994, %v993
    %v1015 = vpack.c.b16 %v996, %v995
    %v1016 = vpack.c.b16 %v998, %v997
    %v1017 = vpack.c.b16 %v1000, %v999
    %v1018 = vpack.c.b16 %v1002, %v1001
    %1035 = vmatprep.subr.bf16.mxu0 0
    %1036 = vmatpush1.bf16.msra.mxu0 %v1010
    %1037 = vmatprep.subr.bf16.mxu0 0
    %1038 = vmatpush1.bf16.msra.mxu0 %v1009
    %1039 = vmatprep.subr.bf16.mxu0 0
    %1040 = vmatpush1.bf16.msra.mxu0 %v1008
    %1041 = vmatprep.subr.bf16.mxu0 0
    %1042 = vmatpush1.bf16.msra.mxu0 %v1007
    %1043 = vmatprep.subr.bf16.mxu0 0
    %1044 = vmatpush1.bf16.msra.mxu0 %v1006
    %1045 = vmatprep.subr.bf16.mxu0 0
    %1046 = vmatpush1.bf16.msra.mxu0 %v1005
    %1047 = vmatprep.subr.bf16.mxu0 0
    %1048 = vmatpush1.bf16.msra.mxu0 %v1004
    %1049 = vmatprep.subr.bf16.mxu0 0
    %1050 = vmatpush1.bf16.msra.mxu0 %v1003
    %1051 = vmatprep.subr.bf16.mxu0 0
    %1052 = vmatpush2.bf16.msra.mxu0 %v1018
    %1053 = vmatprep.subr.bf16.mxu0 0
    %1054 = vmatpush2.bf16.msra.mxu0 %v1017
    %1055 = vmatprep.subr.bf16.mxu0 0
    %1056 = vmatpush2.bf16.msra.mxu0 %v1016
    %1057 = vmatprep.subr.bf16.mxu0 0
    %1058 = vmatpush2.bf16.msra.mxu0 %v1015
    %1059 = vmatprep.subr.bf16.mxu0 0
    %1060 = vmatpush2.bf16.msra.mxu0 %v1014
    %1061 = vmatprep.subr.bf16.mxu0 0
    %1062 = vmatpush2.bf16.msra.mxu0 %v1013
    %1063 = vmatprep.subr.bf16.mxu0 0
    %1064 = vmatpush2.bf16.msra.mxu0 %v1012
    %1065 = vmatprep.subr.bf16.mxu0 0
    %1066 = vmatpush2.bf16.msra.mxu0 %v1011
    %1067 = vmatprep.mubr.bf16.mxu0 %v899
    %1068 = vmatmul.mubr.bf16.gmra.mxu0 %v898
    %v1069 = vpop.f32.mrf.mxu0
    %v1070 = vadd.f32 %v937, %v1069
    %v1071 = vpop.f32.mrf.mxu0
    %v1072 = vpop.f32.mrf.mxu0
    %v1073 = vpop.f32.mrf.mxu0
    %1074 = vdwg.mxu0
    %v1075 = vmax.f32 %v1070, 0.0
    %v1076 = vpack.c.bf16 %v1075, %v1075
    %v1077 = vld [vmem:[#allocation11] sm:$0xf]
    %v1078 = vld [vmem:[#allocation11 + $0x4] sm:$0xf]
    %v1079 = vld [vmem:[#allocation11 + $0x8] sm:$0xf]
    %v1080 = vld [vmem:[#allocation11 + $0xc] sm:$0xf]
    %v1081 = vld [vmem:[#allocation11 + $0x10] sm:$0xf]
    %v1082 = vld [vmem:[#allocation11 + $0x14] sm:$0xf]
    %v1083 = vld [vmem:[#allocation11 + $0x18] sm:$0xf]
    %v1084 = vld [vmem:[#allocation11 + $0x1c] sm:$0xf]
    %v1085 = vld [vmem:[#allocation11 + $0x20] sm:$0xf]
    %v1086 = vld [vmem:[#allocation11 + $0x24] sm:$0xf]
    %v1087 = vld [vmem:[#allocation11 + $0x28] sm:$0xf]
    %v1088 = vld [vmem:[#allocation11 + $0x2c] sm:$0xf]
    %v1089 = vld [vmem:[#allocation11 + $0x30] sm:$0xf]
    %v1090 = vld [vmem:[#allocation11 + $0x34] sm:$0xf]
    %v1091 = vld [vmem:[#allocation11 + $0x38] sm:$0xf]
    %v1092 = vld [vmem:[#allocation11 + $0x3c] sm:$0xf]
    %v1093 = vld [vmem:[%s8] sm:$0x1]
    %v1095 = vlaneseq
    %v1096 = vshrl.u32 %v1095, 7
    %v1097 = vsub.s32 0, %v1096
    %v1098 = vrot.slane %v1093, %v1097
    %v1116 = vunpack.c.l.b16 %v1077
    %v1117 = vunpack.c.l.b16 %v1078
    %v1118 = vunpack.c.l.b16 %v1079
    %v1119 = vunpack.c.l.b16 %v1080
    %v1120 = vunpack.c.l.b16 %v1081
    %v1121 = vunpack.c.l.b16 %v1082
    %v1122 = vunpack.c.l.b16 %v1083
    %v1123 = vunpack.c.l.b16 %v1084
    %v1124 = vunpack.c.l.b16 %v1085
    %v1125 = vunpack.c.l.b16 %v1086
    %v1126 = vunpack.c.l.b16 %v1087
    %v1127 = vunpack.c.l.b16 %v1088
    %v1128 = vunpack.c.l.b16 %v1089
    %v1129 = vunpack.c.l.b16 %v1090
    %v1130 = vunpack.c.l.b16 %v1091
    %v1131 = vunpack.c.l.b16 %v1092
    %v1132 = vpack.c.b16 %v1117, %v1116
    %v1133 = vpack.c.b16 %v1119, %v1118
    %v1134 = vpack.c.b16 %v1121, %v1120
    %v1135 = vpack.c.b16 %v1123, %v1122
    %v1136 = vpack.c.b16 %v1125, %v1124
    %v1137 = vpack.c.b16 %v1127, %v1126
    %v1138 = vpack.c.b16 %v1129, %v1128
    %v1139 = vpack.c.b16 %v1131, %v1130
    %1148 = vmatprep.subr.bf16.mxu0 0
    %1149 = vmatpush1.bf16.msra.mxu0 %v1139
    %1150 = vmatprep.subr.bf16.mxu0 0
    %1151 = vmatpush1.bf16.msra.mxu0 %v1138
    %1152 = vmatprep.subr.bf16.mxu0 0
    %1153 = vmatpush1.bf16.msra.mxu0 %v1137
    %1154 = vmatprep.subr.bf16.mxu0 0
    %1155 = vmatpush1.bf16.msra.mxu0 %v1136
    %1156 = vmatprep.subr.bf16.mxu0 0
    %1157 = vmatpush1.bf16.msra.mxu0 %v1135
    %1158 = vmatprep.subr.bf16.mxu0 0
    %1159 = vmatpush1.bf16.msra.mxu0 %v1134
    %1160 = vmatprep.subr.bf16.mxu0 0
    %1161 = vmatpush1.bf16.msra.mxu0 %v1133
    %1162 = vmatprep.subr.bf16.mxu0 0
    %1163 = vmatpush1.bf16.msra.mxu0 %v1132
    %1164 = vmatprep.subr.bf16.mxu0 0
    %1165 = vmatpush2.bf16.msra.mxu0 0
    %1166 = vmatprep.subr.bf16.mxu0 0
    %1167 = vmatpush2.bf16.msra.mxu0 0
    %1168 = vmatprep.subr.bf16.mxu0 0
    %1169 = vmatpush2.bf16.msra.mxu0 0
    %1170 = vmatprep.subr.bf16.mxu0 0
    %1171 = vmatpush2.bf16.msra.mxu0 0
    %1172 = vmatprep.subr.bf16.mxu0 0
    %1173 = vmatpush2.bf16.msra.mxu0 0
    %1174 = vmatprep.subr.bf16.mxu0 0
    %1175 = vmatpush2.bf16.msra.mxu0 0
    %1176 = vmatprep.subr.bf16.mxu0 0
    %1177 = vmatpush2.bf16.msra.mxu0 0
    %1178 = vmatprep.subr.bf16.mxu0 0
    %1179 = vmatpush2.bf16.msra.mxu0 0
    %1180 = vmatprep.mubr.bf16.mxu0 0
    %1181 = vmatmul.mubr.bf16.gmra.mxu0 %v1076
    %v1182 = vpop.f32.mrf.mxu0
    %v1183 = vadd.f32 %v1098, %v1182
    %v1184 = vpop.f32.mrf.mxu0
    %v1185 = vpop.f32.mrf.mxu0
    %v1186 = vpop.f32.mrf.mxu0
    %1187 = vdwg.mxu0
    %1188 = vst [vmem:[#allocation13] sm:$0xff] %v1183
    // Predicated region
    $region62: #{classifier_mnist_forward.1} parent=1 // pred_check
      _
    $region63: #{classifier_mnist_forward.1} parent=1 // pred_check_branch
      %1190 = sbr.rel (0) target = $region65
    $region64: #{classifier_mnist_forward.1} parent=1 // pred_region
      %s1192 = ssub.s32 128, 128
      %1193 = vsyncadd [#allocation4], %s1192
      %s1195 = sshll.u32 [#allocation13], 4
      %s1196 = int_to_ptr.vmem [resolvable:$true] %s1195
      %1198 = dma.vmem_to_hbm [thread:$0]  %s1196, 128, %s9, [#allocation4]
    $region65: #{classifier_mnist_forward.1} parent=1 // pred_fallthru
      _
    // Predicated region
    $region66: #{classifier_mnist_forward.1} parent=1 // pred_check
      _
    $region67: #{classifier_mnist_forward.1} parent=1 // pred_check_branch
      %1200 = sbr.rel (0) target = $region69
    $region68: #{classifier_mnist_forward.1} parent=1 // pred_region
      %1201 = dma.done [#allocation4], 128
    $region69: #{classifier_mnist_forward.1} parent=1 // pred_fallthru
      _
    %1202 = vsyncpa [#allocation3], 1
    %1203 = vsyncpa [#allocation6], 1
    %1204 = vsyncpa [#allocation9], 1
    %1205 = vsyncpa [#allocation12], 1
    %1206 = vsyncpa [#allocation4], 1

</llo_original>
